<compile_context>
chip_gen: v5e
topology: v5e:2x2
jax: 0.10.0
libtpu: 0.0.40
codegen_flags: <defaults>
</compile_context>

<pallas_src>
import functools

import jax
import jax.numpy as jnp
from jax.experimental import pallas as pl
from jax.experimental.pallas import tpu as pltpu

ALPHA = 1.0
GAMMA = 2  # statically 2 -> use w*w instead of pow (stays on the VPU)


def _focal_loss_kernel(logits_ref, targets_ref, out_ref, *, batch, block_rows,
                       needs_mask):
    # Load in native dtype (narrow DMA), do all math in f32.
    x = logits_ref[...].astype(jnp.float32)
    t = targets_ref[...].astype(jnp.float32)

    if needs_mask:
        # Rows beyond `batch` in the ragged last block hold unspecified data.
        # Neutralize them before any transcendental and zero their contribution.
        i = pl.program_id(0)
        rows = jax.lax.broadcasted_iota(jnp.int32, (block_rows, 1), 0)
        valid = (rows + i * block_rows) < batch
        x = jnp.where(valid, x, 0.0)
        t = jnp.where(valid, t, 0.0)

    # binary_cross_entropy_with_logits(reduction='none'), numerically stable:
    #   max(x, 0) - x*t + log(1 + exp(-|x|))
    e = jnp.exp(-jnp.abs(x))                      # shared with sigmoid below
    bce = jnp.maximum(x, 0.0) - x * t + jnp.log1p(e)

    # sigmoid(x) reusing e = exp(-|x|):  x>=0 -> 1/(1+e),  x<0 -> e/(1+e)
    r = pl.reciprocal(1.0 + e, approx=True)
    probs = jnp.where(x >= 0.0, r, e * r)

    p_t = jnp.where(t == 1.0, probs, 1.0 - probs)
    w = 1.0 - p_t
    fl = ALPHA * (w * w) * bce                    # gamma == 2 -> one VPU mul

    if needs_mask:
        fl = jnp.where(valid, fl, 0.0)

    # Per-block partial sums (sublane reduce only). Cross-block sum happens in JAX
    # so the grid axis stays "parallel" (uses both TensorCores on v7x).
    out_ref[0] = jnp.sum(fl, axis=0, keepdims=True)


def _choose_block_rows(C):
    # Size the batch tile against VMEM: 2 inputs x double-buffer x TB x lanes x 4B,
    # kept comfortably under the default scoped VMEM on every generation
    # (including v7x's smaller 64 MiB physical / 32 MiB scoped budget).
    lane_c = max(128, C)                          # lanes pad to 128 in VMEM
    budget_bytes = 8 * 1024 * 1024
    rows = budget_bytes // (2 * 2 * lane_c * 4)
    return int(max(8, min(2048, (rows // 8) * 8)))


@functools.partial(jax.jit, static_argnames=("size_average", "block_rows"))
def focal_loss(logits, targets, size_average=True, block_rows=None):
    # TODO(synk): sample_weight / attr_idx (ratio2weight) re-weighting branch not
    # implemented (module default sample_weight=None path).
    B, C = logits.shape

    tb_max = block_rows if block_rows is not None else _choose_block_rows(C)
    if B <= tb_max:
        # Single block covering the whole batch: block dim == array dim is legal
        # even when not a multiple of 8; no padding, no masking needed.
        tb = B
    else:
        tb = tb_max                               # multiple of 8
    grid = pl.cdiv(B, tb)
    needs_mask = (grid * tb) != B                 # ragged last block

    kernel = functools.partial(
        _focal_loss_kernel, batch=B, block_rows=tb, needs_mask=needs_mask)

    partials = pl.pallas_call(
        kernel,
        out_shape=jax.ShapeDtypeStruct((grid, 1, C), jnp.float32),
        grid_spec=pltpu.PrefetchScalarGridSpec(
            num_scalar_prefetch=0,
            grid=(grid,),
            in_specs=[
                pl.BlockSpec((tb, C), lambda i: (i, 0)),
                pl.BlockSpec((tb, C), lambda i: (i, 0)),
            ],
            out_specs=pl.BlockSpec((1, 1, C), lambda i: (i, 0, 0)),
        ),
        compiler_params=pltpu.CompilerParams(
            dimension_semantics=("parallel",),
        ),
    )(logits, targets)

    total = jnp.sum(partials)
    return total / B if size_average else total


def _reference(logits, targets, size_average=True):
    x = logits.astype(jnp.float32)
    t = targets.astype(jnp.float32)
    bce = jnp.maximum(x, 0.0) - x * t + jnp.log1p(jnp.exp(-jnp.abs(x)))
    probs = jax.nn.sigmoid(x)
    p_t = jnp.where(t == 1.0, probs, 1.0 - probs)
    fl = ALPHA * ((1.0 - p_t) ** GAMMA) * bce
    s = jnp.sum(fl)
    return s / logits.shape[0] if size_average else s


if __name__ == "__main__":
    key = jax.random.PRNGKey(0)
    k1, k2, k3, k4 = jax.random.split(key, 4)

    # Case 1: small multi-label attribute setup (single block, no mask path).
    B, C = 2, 26
    logits = jax.random.normal(k1, (B, C), dtype=jnp.float32)
    targets = (jax.random.uniform(k2, (B, C)) > 0.5).astype(jnp.float32)

    loss = focal_loss(logits, targets, size_average=True)
    jax.block_until_ready(loss)
    ref = _reference(logits, targets, size_average=True)
    assert jnp.allclose(loss, ref, rtol=5e-3, atol=5e-3), (loss, ref)

    # Case 2: multi-block grid with a ragged last block (exercises the iota mask
    # and the "parallel" partial-sum reduction).
    B2, C2 = 20, 26
    logits2 = jax.random.normal(k3, (B2, C2), dtype=jnp.float32)
    targets2 = (jax.random.uniform(k4, (B2, C2)) > 0.5).astype(jnp.float32)

    loss2 = focal_loss(logits2, targets2, size_average=True, block_rows=8)
    jax.block_until_ready(loss2)
    ref2 = _reference(logits2, targets2, size_average=True)
    assert jnp.allclose(loss2, ref2, rtol=5e-3, atol=5e-3), (loss2, ref2)

    print("KERNEL_OK")
</pallas_src>

<mosaic_0001>
module attributes {stable_mosaic.version = 11 : i64} {
  func.func @_focal_loss_kernel(%arg0: i32, %arg1: memref<2x26xf32, #tpu.memory_space<vmem>>, %arg2: memref<2x26xf32, #tpu.memory_space<vmem>>, %arg3: memref<1x1x26xf32, #tpu.memory_space<vmem>>) attributes {dimension_semantics = [#tpu.dimension_semantics<parallel>], iteration_bounds = array<i64: 1>, scalar_prefetch = 0 : i64, scratch_operands = 0 : i64, tpu.core_type = #tpu.core_type<tc>, window_params = [{transform_indices = @transform_0, window_bounds = array<i64: 2, 26>}, {transform_indices = @transform_1, window_bounds = array<i64: 2, 26>}, {transform_indices = @transform_2, window_bounds = array<i64: 1, 1, 26>}]} {
    %c0 = arith.constant 0 : index
    %c0_0 = arith.constant 0 : index
    %0 = vector.load %arg1[%c0, %c0_0] : memref<2x26xf32, #tpu.memory_space<vmem>>, vector<2x26xf32>
    %c0_1 = arith.constant 0 : index
    %c0_2 = arith.constant 0 : index
    %1 = vector.load %arg2[%c0_1, %c0_2] : memref<2x26xf32, #tpu.memory_space<vmem>>, vector<2x26xf32>
    %2 = math.absf %0 : vector<2x26xf32>
    %cst = arith.constant 0.000000e+00 : f32
    %3 = vector.broadcast %cst : f32 to vector<2x26xf32>
    %4 = arith.subf %3, %2 : vector<2x26xf32>
    %5 = math.exp %4 : vector<2x26xf32>
    %cst_3 = arith.constant 0.000000e+00 : f32
    %6 = vector.broadcast %cst_3 : f32 to vector<2x26xf32>
    %7 = arith.maximumf %0, %6 : vector<2x26xf32>
    %8 = arith.mulf %0, %1 : vector<2x26xf32>
    %9 = arith.subf %7, %8 : vector<2x26xf32>
    %10 = math.log1p %5 : vector<2x26xf32>
    %11 = arith.addf %9, %10 : vector<2x26xf32>
    %cst_4 = arith.constant 1.000000e+00 : f32
    %12 = vector.broadcast %cst_4 : f32 to vector<2x26xf32>
    %13 = arith.addf %12, %5 : vector<2x26xf32>
    %14 = tpu.reciprocal %13 {approx = true} : vector<2x26xf32> -> vector<2x26xf32>
    %cst_5 = arith.constant 0.000000e+00 : f32
    %15 = vector.broadcast %cst_5 : f32 to vector<2x26xf32>
    %16 = arith.cmpf oge, %0, %15 : vector<2x26xf32>
    %17 = arith.mulf %5, %14 : vector<2x26xf32>
    %18 = arith.select %16, %14, %17 : vector<2x26xi1>, vector<2x26xf32>
    %cst_6 = arith.constant 1.000000e+00 : f32
    %19 = vector.broadcast %cst_6 : f32 to vector<2x26xf32>
    %20 = arith.cmpf oeq, %1, %19 : vector<2x26xf32>
    %cst_7 = arith.constant 1.000000e+00 : f32
    %21 = vector.broadcast %cst_7 : f32 to vector<2x26xf32>
    %22 = arith.subf %21, %18 : vector<2x26xf32>
    %23 = arith.select %20, %18, %22 : vector<2x26xi1>, vector<2x26xf32>
    %cst_8 = arith.constant 1.000000e+00 : f32
    %24 = vector.broadcast %cst_8 : f32 to vector<2x26xf32>
    %25 = arith.subf %24, %23 : vector<2x26xf32>
    %26 = arith.mulf %25, %25 : vector<2x26xf32>
    %cst_9 = arith.constant 1.000000e+00 : f32
    %27 = vector.broadcast %cst_9 : f32 to vector<2x26xf32>
    %28 = arith.mulf %27, %26 : vector<2x26xf32>
    %29 = arith.mulf %28, %11 : vector<2x26xf32>
    %cst_10 = arith.constant dense<0.000000e+00> : vector<26xf32>
    %30 = vector.multi_reduction <add>, %29, %cst_10 [0] : vector<2x26xf32> to vector<26xf32>
    %31 = vector.shape_cast %30 : vector<26xf32> to vector<1x26xf32>
    %c0_11 = arith.constant 0 : index
    %c0_12 = arith.constant 0 : index
    %c0_13 = arith.constant 0 : index
    %32 = vector.load %arg3[%c0_11, %c0_12, %c0_13] : memref<1x1x26xf32, #tpu.memory_space<vmem>>, vector<1x1x26xf32>
    %33 = vector.shape_cast %32 : vector<1x1x26xf32> to vector<1x26xf32>
    %34 = vector.shape_cast %31 : vector<1x26xf32> to vector<1x1x26xf32>
    tpu.vector_store %arg3[%c0_11, %c0_12, %c0_13], %34 {strides = array<i32>} : memref<1x1x26xf32, #tpu.memory_space<vmem>>, vector<1x1x26xf32>,
    return
  }
  func.func @transform_0(%arg0: i32) -> (i32, i32) {
    %c0_i32 = arith.constant 0 : i32
    %c0_i32_0 = arith.constant 0 : i32
    return %arg0, %c0_i32 : i32, i32
  }
  func.func @transform_1(%arg0: i32) -> (i32, i32) {
    %c0_i32 = arith.constant 0 : i32
    %c0_i32_0 = arith.constant 0 : i32
    return %arg0, %c0_i32 : i32, i32
  }
  func.func @transform_2(%arg0: i32) -> (i32, i32, i32) {
    %c0_i32 = arith.constant 0 : i32
    %c0_i32_0 = arith.constant 0 : i32
    %c0_i32_1 = arith.constant 0 : i32
    return %arg0, %c0_i32, %c0_i32_0 : i32, i32, i32
  }
}

</mosaic_0001>

<llo_original>
// kernel: focal_loss.1
$region0: #{focal_loss.1}
  #allocation0 [shape = 'u32[]', space=smem, size = 0x4, offset = 0x4, fixed_abs, tag = 'smem constant byte address 0x4 - core index']
  #allocation1 [shape = 'u32[72,128]{1,0:T(1,128)}', space=vmem, size = 0x9000, scoped, tag = 'internal scratch']
  %s0 = inlined_call_operand.hbm [shape: f32[2,26], index: 0, kind: input, shape index: {}]
  %s1 = inlined_call_operand.hbm [shape: f32[2,26], index: 1, kind: input, shape index: {}]
  %s2 = inlined_call_operand.vmem [shape: f32[1,1,26], index: 2, kind: output, shape index: {}]
  %s3 = sld [smem:[#allocation0]]
  $region26: #{focal_loss.1} parent=0
    _
  %s5 = ssub.s32 1, %s3
  %s6 = scalar_select 0, %s5, %s3
  $region1: #{focal_loss.1} parent=0
    #allocation2 [shape = 'u8[1024]{0}', space=vmem, size = 0x400, scoped, tag = 'input window, operand 0, single buffered']
    #allocation3 [shape = 's32[1]{0}', space=sflag, size = 0x4, scoped, tag = 'scoped memory for focal_loss.1']
    #allocation4 [shape = 'u8[1024]{0}', space=vmem, size = 0x400, scoped, tag = 'input window, operand 1, single buffered']
    #allocation5 [shape = 's32[1]{0}', space=sflag, size = 0x4, scoped, tag = 'scoped memory for focal_loss.1']
    %7 = vsyncpa [#allocation3], 0
    %8 = vsyncpa [#allocation5], 0
    // Predicated region
    $region2: #{focal_loss.1} parent=1 // pred_check
      _
    $region3: #{focal_loss.1} parent=1 // pred_check_branch
      %10 = sbr.rel (0) target = $region5
    $region4: #{focal_loss.1} parent=1 // pred_region
      %12 = vsyncadd [#allocation3], 0
      %s14 = sshll.u32 %s0, 4
      %s15 = int_to_ptr.hbm [resolvable:$true] %s14
      %s16 = sshll.u32 [#allocation2], 4
      %s17 = int_to_ptr.vmem [resolvable:$true] %s16
      %19 = dma.hbm_to_vmem [thread:$0]  %s15, 32, %s17, [#allocation3]
    $region5: #{focal_loss.1} parent=1 // pred_fallthru
      _
    // Predicated region
    $region6: #{focal_loss.1} parent=1 // pred_check
      _
    $region7: #{focal_loss.1} parent=1 // pred_check_branch
      %21 = sbr.rel (0) target = $region9
    $region8: #{focal_loss.1} parent=1 // pred_region
      %23 = vsyncadd [#allocation5], 0
      %s25 = sshll.u32 %s1, 4
      %s26 = int_to_ptr.hbm [resolvable:$true] %s25
      %s27 = sshll.u32 [#allocation4], 4
      %s28 = int_to_ptr.vmem [resolvable:$true] %s27
      %30 = dma.hbm_to_vmem [thread:$0]  %s26, 32, %s28, [#allocation5]
    $region9: #{focal_loss.1} parent=1 // pred_fallthru
      _
    // Predicated region
    $region10: #{focal_loss.1} parent=1 // pred_check
      _
    $region11: #{focal_loss.1} parent=1 // pred_check_branch
      %32 = sbr.rel (0) target = $region13
    $region12: #{focal_loss.1} parent=1 // pred_region
      %34 = dma.done [#allocation3], 32
    $region13: #{focal_loss.1} parent=1 // pred_fallthru
      _
    // Predicated region
    $region14: #{focal_loss.1} parent=1 // pred_check
      _
    $region15: #{focal_loss.1} parent=1 // pred_check_branch
      %36 = sbr.rel (0) target = $region17
    $region16: #{focal_loss.1} parent=1 // pred_region
      %38 = dma.done [#allocation5], 32
    $region17: #{focal_loss.1} parent=1 // pred_fallthru
      _
    %v39 = vld [vmem:[#allocation2] sm:$0x3]
    %v40 = vld [vmem:[#allocation4] sm:$0x3]
    %v41 = vand.u32 2147483647, %v39
    %v42 = vsub.f32 0.0, %v41
    %v43 = vmul.f32 %v42, 1.442695
    %v44 = vpow.pop %v43
    %v45 = vmax.f32 %v39, 0.0
    %v46 = vmul.f32 %v39, %v40
    %v47 = vsub.f32 %v45, %v46
    %v48 = vadd.f32 %v44, 1.0
    %v49 = vlog2.pop %v48
    %v50 = vmul.f32 %v49, 0.6931472
    %v51 = vmul.f32 -0.5, %v44
    %v52 = vadd.f32 %v51, 1.0
    %v53 = vmul.f32 %v52, %v44
    %v54 = vand.u32 2147483647, %v44
    %vm55 = vcmp.lt.f32.partialorder %v54, 0.0004427343
    %v56 = vsel %vm55, %v53, %v50
    %v57 = vadd.f32 %v47, %v56
    %v58 = vadd.f32 %v44, 1.0
    %v59 = vrcp.pop %v58
    %vm60 = vcmp.ge.f32.partialorder %v39, 0.0
    %v61 = vmul.f32 %v44, %v59
    %v62 = vsel %vm60, %v59, %v61
    %vm63 = vcmp.eq.f32.partialorder %v40, 1.0
    %v64 = vsub.f32 1.0, %v62
    %v65 = vsel %vm63, %v62, %v64
    %v66 = vsub.f32 1.0, %v65
    %v67 = vmul.f32 %v66, %v66
    %v68 = vmul.f32 %v67, %v57
    %vm69 = vcmask 205824
    %v70 = vsel %vm69, %v68, 0.0
    %v71 = vrot.slane %v70, 4
    %v72 = vadd.f32 %v70, %v71
    %v73 = vrot.slane %v72, 2
    %v74 = vadd.f32 %v72, %v73
    %v75 = vrot.slane %v74, 1
    %v76 = vadd.f32 %v74, %v75
    %vm77 = vcmask 204800
    %78 = vst.msk [vmem:[%s2] sm:$0x1] %vm77, %v76
    // Predicated region
    $region18: #{focal_loss.1} parent=1 // pred_check
      _
    $region19: #{focal_loss.1} parent=1 // pred_check_branch
      %80 = sbr.rel (0) target = $region21
    $region20: #{focal_loss.1} parent=1 // pred_region
      _
    $region21: #{focal_loss.1} parent=1 // pred_fallthru
      _
    // Predicated region
    $region22: #{focal_loss.1} parent=1 // pred_check
      _
    $region23: #{focal_loss.1} parent=1 // pred_check_branch
      %82 = sbr.rel (0) target = $region25
    $region24: #{focal_loss.1} parent=1 // pred_region
      _
    $region25: #{focal_loss.1} parent=1 // pred_fallthru
      _
    %83 = vsyncpa [#allocation3], 1
    %84 = vsyncpa [#allocation5], 1

</llo_original>
